<compile_context>
chip_gen: v5e
topology: v5e:2x2
jax: 0.10.0
libtpu: 0.0.40
codegen_flags: <defaults>
</compile_context>

<pallas_src>
import functools

import jax
import jax.numpy as jnp
from jax.experimental import pallas as pl
from jax.experimental.pallas import tpu as pltpu


def _round_up(n, m):
    return ((n + m - 1) // m) * m


def _cdiv(a, b):
    return -(-a // b)


def _nn_kernel(xT_ref, w1T_ref, b1_ref, whT_ref, bh_ref, outT_ref):
    xT = xT_ref[...]                                   # (d_in, Bb)  batch on lanes
    w1T = w1T_ref[...]                                 # (H, d_in)
    d_in = w1T.shape[1]

    # ---- fc1 + ReLU on the VPU (K = d_in is tiny; MXU would be ~2% utilized) ----
    # Implicit broadcasting: (H,1) * (1,Bb) -> (H,Bb); splats folded by Mosaic,
    # no explicit broadcast_to materialization.
    acc = b1_ref[...] + w1T[:, 0:1] * xT[0:1, :]       # (H, Bb)
    for d in range(1, d_in):                           # static unroll, d_in is small
        acc = acc + w1T[:, d:d + 1] * xT[d:d + 1, :]
    h = jnp.maximum(acc, 0.0)                          # (H, Bb)

    # ---- fused heads on the MXU: (2, H) @ (H, Bb) -> (2, Bb), lane-dense in Bb ----
    z = jnp.dot(whT_ref[...], h, preferred_element_type=jnp.float32) + bh_ref[...]

    # row 0 = mean (identity); row 1 = variance (stable softplus + 1e-4)
    sp = jnp.maximum(z, 0.0) + jnp.log1p(jnp.exp(-jnp.abs(z))) + 1e-4
    row = jax.lax.broadcasted_iota(jnp.int32, z.shape, 0)
    outT_ref[...] = jnp.where(row == 0, z, sp)         # single full (2, Bb) store


def _choose_block(B, block_b_max):
    """Balanced, 128-multiple batch blocks; >=2 grid steps when batch allows."""
    Bp0 = _round_up(max(B, 1), 128)                    # lane padding only
    nb = max(_cdiv(Bp0, block_b_max), 1)               # respect the block cap
    if Bp0 >= 256:
        nb = max(nb, 2)                                # >=2 steps -> both v7x TCs work
    block_b = _round_up(_cdiv(Bp0, nb), 128)           # balanced blocks (waste < 128/blk)
    Bp = _round_up(Bp0, block_b)                       # exact grid
    return block_b, Bp


@functools.partial(jax.jit, static_argnames=("block_b_max",))
def nn_forward(x, w1, b1, wm, bm, wv, bv, *, block_b_max=8192):
    """x: (B, input_dim) f32. Returns (mean, variance), each of shape (B,).

    Weights are stored as (in_features, out_features); biases as (1, out_features).
    """
    x = x.astype(jnp.float32)
    B, d_in = x.shape
    H = w1.shape[1]

    block_b, Bp = _choose_block(B, block_b_max)

    # Transpose + pad is inside this jit, so XLA fuses it with the pallas_call
    # operand preparation instead of making an extra standalone HBM pass.
    xT = jnp.pad(x.T, ((0, 0), (0, Bp - B)))               # (d_in, Bp)
    w1T = w1.T.astype(jnp.float32)                          # (H, d_in)
    b1c = b1.reshape(1, H).T.astype(jnp.float32)            # (H, 1)
    whT = jnp.concatenate([wm, wv], axis=1).T.astype(jnp.float32)   # (2, H)
    bhc = jnp.concatenate([bm, bv], axis=1).T.astype(jnp.float32)   # (2, 1)

    grid = (Bp // block_b,)
    outT = pl.pallas_call(
        _nn_kernel,
        out_shape=jax.ShapeDtypeStruct((2, Bp), jnp.float32),
        grid=grid,
        in_specs=[
            pl.BlockSpec((d_in, block_b), lambda i: (0, i)),   # x tile per grid step
            pl.BlockSpec((H, d_in), lambda i: (0, 0)),         # small weights: full blocks
            pl.BlockSpec((H, 1), lambda i: (0, 0)),
            pl.BlockSpec((2, H), lambda i: (0, 0)),
            pl.BlockSpec((2, 1), lambda i: (0, 0)),
        ],
        out_specs=pl.BlockSpec((2, block_b), lambda i: (0, i)),
        compiler_params=pltpu.CompilerParams(
            dimension_semantics=("parallel",)),                # megacore sharding on v7x
    )(xT, w1T, b1c, whT, bhc)

    return outT[0, :B], outT[1, :B]


def init_params(key, input_dim=2, hidden_dim=50):
    """Deterministic parameter init (shapes match the torch module)."""
    k1, k2, k3, k4, k5 = jax.random.split(key, 5)
    bnd1 = 1.0 / jnp.sqrt(input_dim)
    bndh = 1.0 / jnp.sqrt(hidden_dim)
    w1 = jax.random.uniform(k1, (input_dim, hidden_dim), jnp.float32, -bnd1, bnd1)
    b1 = jax.random.uniform(k2, (1, hidden_dim), jnp.float32, -bnd1, bnd1)
    wm = jax.random.uniform(k3, (hidden_dim, 1), jnp.float32, -bndh, bndh)
    bm = jax.random.uniform(k4, (1, 1), jnp.float32, -bndh, bndh)
    wv = jax.random.uniform(k5, (hidden_dim, 1), jnp.float32, -bndh, bndh)
    bv = jnp.full((1, 1), -5.0, jnp.float32)   # nn.init.constant_(out_var.bias, -5.0)
    return w1, b1, wm, bm, wv, bv


def _reference(x, w1, b1, wm, bm, wv, bv):
    h = jnp.maximum(x @ w1 + b1, 0.0)
    ref_mean = (h @ wm + bm)[:, 0]
    ref_var = (jax.nn.softplus(h @ wv + bv) + 1e-4)[:, 0]
    return ref_mean, ref_var


# TODO(synk): posterior_robust (host-side loop with torch RNG over design points) is
# training/acquisition glue, not part of the forward pass; not translated to Pallas.

if __name__ == "__main__":
    key = jax.random.PRNGKey(0)
    kx, kx2, kp = jax.random.split(key, 3)

    INPUT_DIM, HIDDEN_DIM = 2, 50
    params = init_params(kp, INPUT_DIM, HIDDEN_DIM)

    # Small batch (matches the module's typical use).
    B = 8
    x = jax.random.normal(kx, (B, INPUT_DIM), jnp.float32)
    mean, variance = nn_forward(x, *params)
    jax.block_until_ready((mean, variance))
    ref_mean, ref_var = _reference(x, *params)
    assert mean.shape == (B,) and variance.shape == (B,)
    assert jnp.allclose(mean, ref_mean, atol=1e-5)
    assert jnp.allclose(variance, ref_var, atol=1e-5)

    # Larger, non-128-multiple batch to exercise padding + balanced 2-block grid.
    B2 = 300
    x2 = jax.random.normal(kx2, (B2, INPUT_DIM), jnp.float32)
    mean2, var2 = nn_forward(x2, *params)
    jax.block_until_ready((mean2, var2))
    ref_mean2, ref_var2 = _reference(x2, *params)
    assert mean2.shape == (B2,) and var2.shape == (B2,)
    assert jnp.allclose(mean2, ref_mean2, atol=1e-5)
    assert jnp.allclose(var2, ref_var2, atol=1e-5)

    print("KERNEL_OK")
</pallas_src>

<mosaic_0001>
module attributes {stable_mosaic.version = 11 : i64} {
  func.func @_nn_kernel(%arg0: i32, %arg1: memref<2x128xf32, #tpu.memory_space<vmem>>, %arg2: memref<50x2xf32, #tpu.memory_space<vmem>>, %arg3: memref<50x1xf32, #tpu.memory_space<vmem>>, %arg4: memref<2x50xf32, #tpu.memory_space<vmem>>, %arg5: memref<2x1xf32, #tpu.memory_space<vmem>>, %arg6: memref<2x128xf32, #tpu.memory_space<vmem>>) attributes {dimension_semantics = [#tpu.dimension_semantics<parallel>], iteration_bounds = array<i64: 1>, scalar_prefetch = 0 : i64, scratch_operands = 0 : i64, tpu.core_type = #tpu.core_type<tc>, window_params = [{transform_indices = @transform_0, window_bounds = array<i64: 2, 128>}, {pipeline_mode = #tpu.pipeline_mode<synchronous>, transform_indices = @transform_1, window_bounds = array<i64: 50, 2>}, {pipeline_mode = #tpu.pipeline_mode<synchronous>, transform_indices = @transform_2, window_bounds = array<i64: 50, 1>}, {pipeline_mode = #tpu.pipeline_mode<synchronous>, transform_indices = @transform_3, window_bounds = array<i64: 2, 50>}, {pipeline_mode = #tpu.pipeline_mode<synchronous>, transform_indices = @transform_4, window_bounds = array<i64: 2, 1>}, {transform_indices = @transform_5, window_bounds = array<i64: 2, 128>}]} {
    %c0 = arith.constant 0 : index
    %c0_0 = arith.constant 0 : index
    %0 = vector.load %arg1[%c0, %c0_0] : memref<2x128xf32, #tpu.memory_space<vmem>>, vector<2x128xf32>
    %c0_1 = arith.constant 0 : index
    %c0_2 = arith.constant 0 : index
    %1 = vector.load %arg2[%c0_1, %c0_2] : memref<50x2xf32, #tpu.memory_space<vmem>>, vector<50x2xf32>
    %c0_3 = arith.constant 0 : index
    %c0_4 = arith.constant 0 : index
    %2 = vector.load %arg3[%c0_3, %c0_4] : memref<50x1xf32, #tpu.memory_space<vmem>>, vector<50x1xf32>
    %3 = vector.extract_strided_slice %1 {offsets = [0, 0], sizes = [50, 1], strides = [1, 1]} : vector<50x2xf32> to vector<50x1xf32>
    %4 = vector.extract_strided_slice %0 {offsets = [0, 0], sizes = [1, 128], strides = [1, 1]} : vector<2x128xf32> to vector<1x128xf32>
    %5 = vector.broadcast %3 : vector<50x1xf32> to vector<50x128xf32>
    %6 = vector.broadcast %4 : vector<1x128xf32> to vector<50x128xf32>
    %7 = arith.mulf %5, %6 : vector<50x128xf32>
    %8 = vector.broadcast %2 : vector<50x1xf32> to vector<50x128xf32>
    %9 = arith.addf %8, %7 : vector<50x128xf32>
    %10 = vector.extract_strided_slice %1 {offsets = [0, 1], sizes = [50, 1], strides = [1, 1]} : vector<50x2xf32> to vector<50x1xf32>
    %11 = vector.extract_strided_slice %0 {offsets = [1, 0], sizes = [1, 128], strides = [1, 1]} : vector<2x128xf32> to vector<1x128xf32>
    %12 = vector.broadcast %10 : vector<50x1xf32> to vector<50x128xf32>
    %13 = vector.broadcast %11 : vector<1x128xf32> to vector<50x128xf32>
    %14 = arith.mulf %12, %13 : vector<50x128xf32>
    %15 = arith.addf %9, %14 : vector<50x128xf32>
    %cst = arith.constant 0.000000e+00 : f32
    %16 = vector.broadcast %cst : f32 to vector<50x128xf32>
    %17 = arith.maximumf %15, %16 : vector<50x128xf32>
    %c0_5 = arith.constant 0 : index
    %c0_6 = arith.constant 0 : index
    %18 = vector.load %arg4[%c0_5, %c0_6] : memref<2x50xf32, #tpu.memory_space<vmem>>, vector<2x50xf32>
    %cst_7 = arith.constant dense<0.000000e+00> : vector<2x128xf32>
    %19 = tpu.matmul %18, %17, %cst_7 {dimension_numbers = #tpu.dot_dimension_numbers<[1], [0], [0], [1], [0, 0, 1, 1], [], []>} : vector<2x50xf32>, vector<50x128xf32>, vector<2x128xf32> -> vector<2x128xf32>
    %c0_8 = arith.constant 0 : index
    %c0_9 = arith.constant 0 : index
    %20 = vector.load %arg5[%c0_8, %c0_9] : memref<2x1xf32, #tpu.memory_space<vmem>>, vector<2x1xf32>
    %21 = vector.broadcast %20 : vector<2x1xf32> to vector<2x128xf32>
    %22 = arith.addf %19, %21 : vector<2x128xf32>
    %cst_10 = arith.constant 0.000000e+00 : f32
    %23 = vector.broadcast %cst_10 : f32 to vector<2x128xf32>
    %24 = arith.maximumf %22, %23 : vector<2x128xf32>
    %25 = math.absf %22 : vector<2x128xf32>
    %cst_11 = arith.constant 0.000000e+00 : f32
    %26 = vector.broadcast %cst_11 : f32 to vector<2x128xf32>
    %27 = arith.subf %26, %25 : vector<2x128xf32>
    %28 = math.exp %27 : vector<2x128xf32>
    %29 = math.log1p %28 : vector<2x128xf32>
    %30 = arith.addf %24, %29 : vector<2x128xf32>
    %cst_12 = arith.constant 9.99999974E-5 : f32
    %31 = vector.broadcast %cst_12 : f32 to vector<2x128xf32>
    %32 = arith.addf %30, %31 : vector<2x128xf32>
    %33 = tpu.iota {dimensions = array<i32: 0>} : vector<2x128xi32>
    %c0_i32 = arith.constant 0 : i32
    %34 = vector.broadcast %c0_i32 : i32 to vector<2x128xi32>
    %35 = arith.cmpi eq, %33, %34 : vector<2x128xi32>
    %36 = arith.select %35, %22, %32 : vector<2x128xi1>, vector<2x128xf32>
    %c0_13 = arith.constant 0 : index
    %c0_14 = arith.constant 0 : index
    %37 = vector.load %arg6[%c0_13, %c0_14] : memref<2x128xf32, #tpu.memory_space<vmem>>, vector<2x128xf32>
    tpu.vector_store %arg6[%c0_13, %c0_14], %36 {strides = array<i32>} : memref<2x128xf32, #tpu.memory_space<vmem>>, vector<2x128xf32>,
    return
  }
  func.func @transform_0(%arg0: i32) -> (i32, i32) {
    %c0_i32 = arith.constant 0 : i32
    %c0_i32_0 = arith.constant 0 : i32
    return %c0_i32, %arg0 : i32, i32
  }
  func.func @transform_1(%arg0: i32) -> (i32, i32) {
    %c0_i32 = arith.constant 0 : i32
    %c0_i32_0 = arith.constant 0 : i32
    %c0_i32_1 = arith.constant 0 : i32
    return %c0_i32, %c0_i32_0 : i32, i32
  }
  func.func @transform_2(%arg0: i32) -> (i32, i32) {
    %c0_i32 = arith.constant 0 : i32
    %c0_i32_0 = arith.constant 0 : i32
    %c0_i32_1 = arith.constant 0 : i32
    return %c0_i32, %c0_i32_0 : i32, i32
  }
  func.func @transform_3(%arg0: i32) -> (i32, i32) {
    %c0_i32 = arith.constant 0 : i32
    %c0_i32_0 = arith.constant 0 : i32
    %c0_i32_1 = arith.constant 0 : i32
    return %c0_i32, %c0_i32_0 : i32, i32
  }
  func.func @transform_4(%arg0: i32) -> (i32, i32) {
    %c0_i32 = arith.constant 0 : i32
    %c0_i32_0 = arith.constant 0 : i32
    %c0_i32_1 = arith.constant 0 : i32
    return %c0_i32, %c0_i32_0 : i32, i32
  }
  func.func @transform_5(%arg0: i32) -> (i32, i32) {
    %c0_i32 = arith.constant 0 : i32
    %c0_i32_0 = arith.constant 0 : i32
    return %c0_i32, %arg0 : i32, i32
  }
}

</mosaic_0001>

<llo_original>
// kernel: nn_forward.1
$region0: #{nn_forward.1}
  #allocation0 [shape = 'u32[]', space=smem, size = 0x4, offset = 0x4, fixed_abs, tag = 'smem constant byte address 0x4 - core index']
  #allocation1 [shape = 'u32[72,128]{1,0:T(1,128)}', space=vmem, size = 0x9000, scoped, tag = 'internal scratch']
  %s0 = inlined_call_operand.vmem [shape: f32[2,128], index: 0, kind: input, shape index: {}]
  %s1 = inlined_call_operand.vmem [shape: f32[50,2], index: 1, kind: input, shape index: {}]
  %s2 = inlined_call_operand.vmem [shape: f32[50,1], index: 2, kind: input, shape index: {}]
  %s3 = inlined_call_operand.vmem [shape: f32[2,50], index: 3, kind: input, shape index: {}]
  %s4 = inlined_call_operand.vmem [shape: f32[2,1], index: 4, kind: input, shape index: {}]
  %s5 = inlined_call_operand.vmem [shape: f32[2,128], index: 5, kind: output, shape index: {}]
  %s6 = sld [smem:[#allocation0]]
  $region30: #{nn_forward.1} parent=0
    _
  %s8 = ssub.s32 1, %s6
  %s9 = scalar_select 0, %s8, %s6
  // Predicated region
  $region2: #{nn_forward.1} parent=0 // pred_check
    _
  $region3: #{nn_forward.1} parent=0 // pred_check_branch
    %11 = sbr.rel (0) target = $region5
  $region4: #{nn_forward.1} parent=0 // pred_region
    _
  $region5: #{nn_forward.1} parent=0 // pred_fallthru
    _
  // Predicated region
  $region6: #{nn_forward.1} parent=0 // pred_check
    _
  $region7: #{nn_forward.1} parent=0 // pred_check_branch
    %13 = sbr.rel (0) target = $region9
  $region8: #{nn_forward.1} parent=0 // pred_region
    _
  $region9: #{nn_forward.1} parent=0 // pred_fallthru
    _
  // Predicated region
  $region10: #{nn_forward.1} parent=0 // pred_check
    _
  $region11: #{nn_forward.1} parent=0 // pred_check_branch
    %15 = sbr.rel (0) target = $region13
  $region12: #{nn_forward.1} parent=0 // pred_region
    _
  $region13: #{nn_forward.1} parent=0 // pred_fallthru
    _
  // Predicated region
  $region14: #{nn_forward.1} parent=0 // pred_check
    _
  $region15: #{nn_forward.1} parent=0 // pred_check_branch
    %17 = sbr.rel (0) target = $region17
  $region16: #{nn_forward.1} parent=0 // pred_region
    _
  $region17: #{nn_forward.1} parent=0 // pred_fallthru
    _
  // Predicated region
  $region18: #{nn_forward.1} parent=0 // pred_check
    _
  $region19: #{nn_forward.1} parent=0 // pred_check_branch
    %19 = sbr.rel (0) target = $region21
  $region20: #{nn_forward.1} parent=0 // pred_region
    _
  $region21: #{nn_forward.1} parent=0 // pred_fallthru
    _
  %v20 = vld [vmem:[%s0] sm:$0x3]
  %v21 = vld [vmem:[%s1] sm:$0xff]
  %v22 = vld [vmem:[%s1 + $0x8] sm:$0xff]
  %v23 = vld [vmem:[%s1 + $0x10] sm:$0xff]
  %v24 = vld [vmem:[%s1 + $0x18] sm:$0xff]
  %v25 = vld [vmem:[%s1 + $0x20] sm:$0xff]
  %v26 = vld [vmem:[%s1 + $0x28] sm:$0xff]
  %v27 = vld [vmem:[%s1 + $0x30] sm:$0x3]
  %v28 = vld [vmem:[%s2] sm:$0xff]
  %v29 = vld [vmem:[%s2 + $0x8] sm:$0xff]
  %v30 = vld [vmem:[%s2 + $0x10] sm:$0xff]
  %v31 = vld [vmem:[%s2 + $0x18] sm:$0xff]
  %v32 = vld [vmem:[%s2 + $0x20] sm:$0xff]
  %v33 = vld [vmem:[%s2 + $0x28] sm:$0xff]
  %v34 = vld [vmem:[%s2 + $0x30] sm:$0x3]
  %36 = vset.pattern.permute.xlu0 0
  %37 = vperm.xlu0 %36, %v21
  %v38 = vpop.permute.xlu0 %37
  %41 = vset.pattern.permute.xlu0 0
  %42 = vperm.xlu0 %41, %v22
  %v43 = vpop.permute.xlu0 %42
  %46 = vset.pattern.permute.xlu0 0
  %47 = vperm.xlu0 %46, %v23
  %v48 = vpop.permute.xlu0 %47
  %51 = vset.pattern.permute.xlu0 0
  %52 = vperm.xlu0 %51, %v24
  %v53 = vpop.permute.xlu0 %52
  %56 = vset.pattern.permute.xlu0 0
  %57 = vperm.xlu0 %56, %v25
  %v58 = vpop.permute.xlu0 %57
  %61 = vset.pattern.permute.xlu0 0
  %62 = vperm.xlu0 %61, %v26
  %v63 = vpop.permute.xlu0 %62
  %66 = vset.pattern.permute.xlu0 0
  %67 = vperm.xlu0 %66, %v27
  %v68 = vpop.permute.xlu0 %67
  %v70 = vperm.slane %v20, 0
  %v71 = vmul.f32 %v38, %v70
  %v72 = vmul.f32 %v43, %v70
  %v73 = vmul.f32 %v48, %v70
  %v74 = vmul.f32 %v53, %v70
  %v75 = vmul.f32 %v58, %v70
  %v76 = vmul.f32 %v63, %v70
  %v77 = vmul.f32 %v68, %v70
  %79 = vset.pattern.permute.xlu0 0
  %80 = vperm.xlu0 %79, %v28
  %v81 = vpop.permute.xlu0 %80
  %84 = vset.pattern.permute.xlu0 0
  %85 = vperm.xlu0 %84, %v29
  %v86 = vpop.permute.xlu0 %85
  %89 = vset.pattern.permute.xlu0 0
  %90 = vperm.xlu0 %89, %v30
  %v91 = vpop.permute.xlu0 %90
  %94 = vset.pattern.permute.xlu0 0
  %95 = vperm.xlu0 %94, %v31
  %v96 = vpop.permute.xlu0 %95
  %99 = vset.pattern.permute.xlu0 0
  %100 = vperm.xlu0 %99, %v32
  %v101 = vpop.permute.xlu0 %100
  %104 = vset.pattern.permute.xlu0 0
  %105 = vperm.xlu0 %104, %v33
  %v106 = vpop.permute.xlu0 %105
  %109 = vset.pattern.permute.xlu0 0
  %110 = vperm.xlu0 %109, %v34
  %v111 = vpop.permute.xlu0 %110
  %v113 = vadd.f32 %v81, %v71
  %v114 = vadd.f32 %v86, %v72
  %v115 = vadd.f32 %v91, %v73
  %v116 = vadd.f32 %v96, %v74
  %v117 = vadd.f32 %v101, %v75
  %v118 = vadd.f32 %v106, %v76
  %v119 = vadd.f32 %v111, %v77
  %120 = vset.pattern.permute.xlu0 1
  %121 = vperm.xlu0 %120, %v21
  %v122 = vpop.permute.xlu0 %121
  %124 = vset.pattern.permute.xlu0 1
  %125 = vperm.xlu0 %124, %v22
  %v126 = vpop.permute.xlu0 %125
  %128 = vset.pattern.permute.xlu0 1
  %129 = vperm.xlu0 %128, %v23
  %v130 = vpop.permute.xlu0 %129
  %132 = vset.pattern.permute.xlu0 1
  %133 = vperm.xlu0 %132, %v24
  %v134 = vpop.permute.xlu0 %133
  %136 = vset.pattern.permute.xlu0 1
  %137 = vperm.xlu0 %136, %v25
  %v138 = vpop.permute.xlu0 %137
  %140 = vset.pattern.permute.xlu0 1
  %141 = vperm.xlu0 %140, %v26
  %v142 = vpop.permute.xlu0 %141
  %144 = vset.pattern.permute.xlu0 1
  %145 = vperm.xlu0 %144, %v27
  %v146 = vpop.permute.xlu0 %145
  %v148 = vperm.slane %v20, 1
  %v149 = vmul.f32 %v122, %v148
  %v150 = vmul.f32 %v126, %v148
  %v151 = vmul.f32 %v130, %v148
  %v152 = vmul.f32 %v134, %v148
  %v153 = vmul.f32 %v138, %v148
  %v154 = vmul.f32 %v142, %v148
  %v155 = vmul.f32 %v146, %v148
  %v156 = vadd.f32 %v113, %v149
  %v157 = vadd.f32 %v114, %v150
  %v158 = vadd.f32 %v115, %v151
  %v159 = vadd.f32 %v116, %v152
  %v160 = vadd.f32 %v117, %v153
  %v161 = vadd.f32 %v118, %v154
  %v162 = vadd.f32 %v119, %v155
  %v163 = vmax.f32 %v156, 0.0
  %v164 = vmax.f32 %v157, 0.0
  %v165 = vmax.f32 %v158, 0.0
  %v166 = vmax.f32 %v159, 0.0
  %v167 = vmax.f32 %v160, 0.0
  %v168 = vmax.f32 %v161, 0.0
  %v169 = vmax.f32 %v162, 0.0
  %v170 = vld [vmem:[%s3] sm:$0x3]
  %v171 = vld [vmem:[%s4] sm:$0x3]
  %173 = vset.pattern.permute.xlu0 0
  %174 = vperm.xlu0 %173, %v171
  %v175 = vpop.permute.xlu0 %174
  %vm177 = vcmask 408576
  %v179 = vsel %vm177, %v170, 0
  %vm181 = vcmask 1041408
  %v183 = vsel %vm181, %v169, 0
  %185 = vmatpush.msra.mxu0 0.0
  %186 = vmatpush.msra.mxu0 0.0
  %187 = vmatpush.msra.mxu0 0.0
  %188 = vmatpush.msra.mxu0 0.0
  %189 = vmatpush.msra.mxu0 0.0
  %190 = vmatpush.msra.mxu0 0.0
  %191 = vmatpush.msra.mxu0 0.0
  %192 = vmatpush.msra.mxu0 0.0
  %193 = vmatpush.msra.mxu0 0.0
  %194 = vmatpush.msra.mxu0 %v183
  %195 = vmatpush.msra.mxu0 %v168
  %196 = vmatpush.msra.mxu0 %v167
  %197 = vmatpush.msra.mxu0 %v166
  %198 = vmatpush.msra.mxu0 %v165
  %199 = vmatpush.msra.mxu0 %v164
  %200 = vmatpush.msra.mxu0 %v163
  %201 = vmatmul.f32.gmra.mxu0 %v179
  %v202 = vpop.f32.mrf.mxu0
  %v203 = vadd.f32 %v175, %v202
  %204 = vdwg.mxu0
  %v205 = vmax.f32 %v203, 0.0
  %v206 = vand.u32 2147483647, %v203
  %v207 = vsub.f32 0.0, %v206
  %v208 = vmul.f32 %v207, 1.442695
  %v209 = vpow.pop %v208
  %v210 = vadd.f32 %v209, 1.0
  %v211 = vlog2.pop %v210
  %v212 = vmul.f32 %v211, 0.6931472
  %v213 = vmul.f32 -0.5, %v209
  %v214 = vadd.f32 %v213, 1.0
  %v215 = vmul.f32 %v214, %v209
  %v216 = vand.u32 2147483647, %v209
  %vm217 = vcmp.lt.f32.partialorder %v216, 0.0004427343
  %v218 = vsel %vm217, %v215, %v212
  %v219 = vadd.f32 %v205, %v218
  %v220 = vadd.f32 %v219, 0.0001
  %v221 = vlaneseq
  %v222 = vshrl.u32 %v221, 7
  %vm223 = vcmp.eq.s32.totalorder %v222, 0
  %v224 = vsel %vm223, %v203, %v220
  %225 = vst [vmem:[%s5] sm:$0x3] %v224
  // Predicated region
  $region22: #{nn_forward.1} parent=0 // pred_check
    _
  $region23: #{nn_forward.1} parent=0 // pred_check_branch
    %227 = sbr.rel (0) target = $region25
  $region24: #{nn_forward.1} parent=0 // pred_region
    _
  $region25: #{nn_forward.1} parent=0 // pred_fallthru
    _
  // Predicated region
  $region26: #{nn_forward.1} parent=0 // pred_check
    _
  $region27: #{nn_forward.1} parent=0 // pred_check_branch
    %229 = sbr.rel (0) target = $region29
  $region28: #{nn_forward.1} parent=0 // pred_region
    _
  $region29: #{nn_forward.1} parent=0 // pred_fallthru
    _

</llo_original>
